<compile_context>
chip_gen: v6e
topology: v6e:2x2x1
jax: 0.10.0
libtpu: 0.0.40
codegen_flags: <defaults>
</compile_context>

<pallas_src>
import jax
import jax.numpy as jnp
from jax import lax
from jax.experimental import pallas as pl
from jax.experimental.pallas import tpu as pltpu

INPUT_SIZE = 1
HIDDEN = 32


def rnn_kernel(x_ref, h0_ref, wih_ref, whh_ref, b_ref, wout_ref, bout_ref,
               y_ref, hT_ref, hist_ref, hcar_ref):
    """One grid step processes one chunk of Tc timesteps.

    x_ref   : (B, Tc)    inputs for this chunk, lane-dense (T on lanes)
    h0_ref  : (B, H)     initial hidden state
    wih_ref : (1, H)     W_ih row (input_size == 1)
    whh_ref : (H, H)     W_hh^T
    b_ref   : (1, H)     b_ih + b_hh
    wout_ref: (1, H)     W_out row
    bout_ref: (1, 1)     b_out
    y_ref   : (B, Tc)    per-timestep linear output for this chunk (lane-dense)
    hT_ref  : (B, H)     final hidden state (resident output block)
    hist_ref: (Tc, B, H) f32 scratch -- merged pre-activation / hidden-state history
    hcar_ref: (B, H)     f32 scratch -- hidden state carried across chunks
    """
    c = pl.program_id(0)
    Tc = hist_ref.shape[0]

    # ---- first chunk: initialize the carried hidden state ---------------------
    @pl.when(c == 0)
    def _():
        hcar_ref[...] = h0_ref[...]

    # ---- hoisted input projection for this chunk (no time dependence) ---------
    w_row = wih_ref[...]                         # (1, H)
    bias = b_ref[...]                            # (1, H)
    x_tb = x_ref[...].T                          # (B, Tc) -> (Tc, B), one XLU transpose
    # (Tc, B, 1) * (1, 1, H) + (1, 1, H) -> (Tc, B, H)
    hist_ref[...] = x_tb[:, :, None] * w_row[None, :, :] + bias[None, :, :]

    whh = whh_ref[...]                           # (H, H) == W_hh^T, loaded once
    h_in = hcar_ref[...]                         # (B, H)

    # ---- serial recurrence: h_t = tanh(pre_t + h_{t-1} @ W_hh^T) ---------------
    # pre_t is read from hist_ref[t] and overwritten in place with h_t (merged scratch).
    def step(t, h):
        h_new = jnp.tanh(hist_ref[t] +
                         jnp.dot(h, whh, preferred_element_type=jnp.float32))
        hist_ref[t] = h_new
        return h_new

    h_last = lax.fori_loop(0, Tc, step, h_in, unroll=min(int(Tc), 8))

    hcar_ref[...] = h_last                       # carry to next chunk
    hT_ref[...] = h_last.astype(hT_ref.dtype)    # resident output; final chunk's write persists

    # ---- batched output projection Linear(H -> 1), once per chunk -------------
    wout = wout_ref[...]                         # (1, H)
    y_tb = jnp.sum(hist_ref[...] * wout[None, :, :], axis=-1)   # (Tc, B)
    y_ref[...] = (y_tb.T + bout_ref[...]).astype(y_ref.dtype)   # (B, Tc), lane-dense


def _pick_chunk(T):
    """Time-chunk size: multiples of 128 keep the x / y blocks lane-aligned; otherwise the
    whole sequence is a single chunk (the previously validated configuration)."""
    for tc in (512, 256, 128):
        if T > tc and T % tc == 0:
            return tc
    return T


def _vmem_bytes_estimate(Tc, B, H):
    """Rough padded-VMEM budget for one kernel instance (f32)."""
    pad = lambda n, m: ((n + m - 1) // m) * m
    slab = pad(B, 8) * pad(H, 128) * 4                 # one padded (B, H) tile
    hist = Tc * slab                                   # merged history scratch
    carry = slab
    xy = 2 * 2 * pad(B, 8) * pad(Tc, 128) * 4          # x + y chunks, double-buffered
    weights = (pad(H, 8) + 8) * pad(H, 128) * 4 + slab # W_hh^T + small rows + h0
    return hist + carry + xy + weights


def rnn_forward(x, h_state, params):
    """x: (B, T, 1) float32; h_state: (1, B, H) float32 or None.
    Returns (outs (B, T, 1), h_state (1, B, H)) matching the PyTorch module."""
    B, T, I = x.shape
    H = HIDDEN
    if h_state is None:
        h_state = jnp.zeros((1, B, H), jnp.float32)

    w_ih, w_hh, b_ih, b_hh, w_out, b_out = params
    x_bt = x[:, :, 0].astype(jnp.float32)                      # (B, T)  lane-dense, no unit dim
    h0 = h_state[0].astype(jnp.float32)                        # (B, H)
    wih_row = w_ih.reshape(1, H).astype(jnp.float32)           # (1, H)   (input_size == 1)
    whh_t = w_hh.T.astype(jnp.float32)                         # (H, H)
    b = (b_ih + b_hh).reshape(1, H).astype(jnp.float32)        # (1, H)
    wout_row = w_out.reshape(1, H).astype(jnp.float32)         # (1, H)
    bout = b_out.reshape(1, 1).astype(jnp.float32)             # (1, 1)

    Tc = _pick_chunk(T)
    n_chunks = T // Tc

    compiler_kwargs = dict(dimension_semantics=("arbitrary",))
    vmem_needed = _vmem_bytes_estimate(Tc, B, H)
    if vmem_needed > (12 << 20):                               # above smallest default scoped VMEM
        compiler_kwargs["vmem_limit_bytes"] = min(vmem_needed * 3 // 2 + (2 << 20), 100 << 20)

    y_bt, h_last = pl.pallas_call(
        rnn_kernel,
        out_shape=(
            jax.ShapeDtypeStruct((B, T), jnp.float32),
            jax.ShapeDtypeStruct((B, H), jnp.float32),
        ),
        grid_spec=pltpu.PrefetchScalarGridSpec(
            num_scalar_prefetch=0,
            grid=(n_chunks,),                                  # serial time-chunk loop
            in_specs=[
                pl.BlockSpec((B, Tc), lambda c: (0, c)),       # x chunk (lane-dense, streamed)
                pl.BlockSpec((B, H),  lambda c: (0, 0)),       # h0
                pl.BlockSpec((1, H),  lambda c: (0, 0)),       # W_ih row
                pl.BlockSpec((H, H),  lambda c: (0, 0)),       # W_hh^T
                pl.BlockSpec((1, H),  lambda c: (0, 0)),       # fused bias
                pl.BlockSpec((1, H),  lambda c: (0, 0)),       # W_out row
                pl.BlockSpec((1, 1),  lambda c: (0, 0)),       # b_out
            ],
            out_specs=[
                pl.BlockSpec((B, Tc), lambda c: (0, c)),       # y chunk (lane-dense, streamed)
                pl.BlockSpec((B, H),  lambda c: (0, 0)),       # final hidden (resident)
            ],
            scratch_shapes=[
                pltpu.VMEM((Tc, B, H), jnp.float32),           # merged pre/hidden history
                pltpu.VMEM((B, H), jnp.float32),               # carried hidden state
            ],
        ),
        compiler_params=pltpu.CompilerParams(**compiler_kwargs),
    )(x_bt, h0, wih_row, whh_t, b, wout_row, bout)

    outs = y_bt[:, :, None]        # (B, T, 1)
    h_final = h_last[None]         # (1, B, H)
    return outs, h_final


def rnn_reference(x, h_state, params):
    """Pure-JAX reference (lax.scan) matching nn.RNN(tanh) + per-step Linear."""
    w_ih, w_hh, b_ih, b_hh, w_out, b_out = params
    B, T, _ = x.shape
    if h_state is None:
        h_state = jnp.zeros((1, B, HIDDEN), jnp.float32)
    h0 = h_state[0]

    def step(h, x_t):
        h_new = jnp.tanh(x_t @ w_ih.T + b_ih + h @ w_hh.T + b_hh)
        y = h_new @ w_out.T + b_out
        return h_new, y

    h_last, ys = lax.scan(step, h0, jnp.transpose(x, (1, 0, 2)))
    return jnp.transpose(ys, (1, 0, 2)), h_last[None]


def init_params(key):
    """Deterministic init mimicking PyTorch uniform(-1/sqrt(H), 1/sqrt(H))."""
    k = 1.0 / jnp.sqrt(jnp.float32(HIDDEN))
    keys = jax.random.split(key, 6)
    w_ih = jax.random.uniform(keys[0], (HIDDEN, INPUT_SIZE), jnp.float32, -k, k)
    w_hh = jax.random.uniform(keys[1], (HIDDEN, HIDDEN), jnp.float32, -k, k)
    b_ih = jax.random.uniform(keys[2], (HIDDEN,), jnp.float32, -k, k)
    b_hh = jax.random.uniform(keys[3], (HIDDEN,), jnp.float32, -k, k)
    w_out = jax.random.uniform(keys[4], (1, HIDDEN), jnp.float32, -k, k)
    b_out = jax.random.uniform(keys[5], (1,), jnp.float32, -k, k)
    return (w_ih, w_hh, b_ih, b_hh, w_out, b_out)


if __name__ == "__main__":
    key = jax.random.PRNGKey(0)
    k_param, k_x = jax.random.split(key)

    B, T = 2, 8
    params = init_params(k_param)
    x = jax.random.normal(k_x, (B, T, INPUT_SIZE), jnp.float32)
    h_state = None  # same as the PyTorch script's initial h_state

    outs, h_final = rnn_forward(x, h_state, params)
    outs, h_final = jax.block_until_ready((outs, h_final))

    ref_outs, ref_h = rnn_reference(x, h_state, params)
    assert outs.shape == (B, T, 1) and h_final.shape == (1, B, HIDDEN)
    assert jnp.allclose(outs, ref_outs, atol=1e-5, rtol=1e-5)
    assert jnp.allclose(h_final, ref_h, atol=1e-5, rtol=1e-5)

    print("KERNEL_OK")
</pallas_src>

<mosaic_0001>
module attributes {stable_mosaic.version = 11 : i64} {
  func.func @rnn_kernel(%arg0: i32, %arg1: memref<2x8xf32, #tpu.memory_space<vmem>>, %arg2: memref<2x32xf32, #tpu.memory_space<vmem>>, %arg3: memref<1x32xf32, #tpu.memory_space<vmem>>, %arg4: memref<32x32xf32, #tpu.memory_space<vmem>>, %arg5: memref<1x32xf32, #tpu.memory_space<vmem>>, %arg6: memref<1x32xf32, #tpu.memory_space<vmem>>, %arg7: memref<1x1xf32, #tpu.memory_space<vmem>>, %arg8: memref<2x8xf32, #tpu.memory_space<vmem>>, %arg9: memref<2x32xf32, #tpu.memory_space<vmem>>, %arg10: memref<8x2x32xf32, #tpu.memory_space<vmem>>, %arg11: memref<2x32xf32, #tpu.memory_space<vmem>>) attributes {dimension_semantics = [#tpu.dimension_semantics<arbitrary>], iteration_bounds = array<i64: 1>, scalar_prefetch = 0 : i64, scratch_operands = 2 : i64, tpu.core_type = #tpu.core_type<tc>, window_params = [{transform_indices = @transform_0, window_bounds = array<i64: 2, 8>}, {pipeline_mode = #tpu.pipeline_mode<synchronous>, transform_indices = @transform_1, window_bounds = array<i64: 2, 32>}, {pipeline_mode = #tpu.pipeline_mode<synchronous>, transform_indices = @transform_2, window_bounds = array<i64: 1, 32>}, {pipeline_mode = #tpu.pipeline_mode<synchronous>, transform_indices = @transform_3, window_bounds = array<i64: 32, 32>}, {pipeline_mode = #tpu.pipeline_mode<synchronous>, transform_indices = @transform_4, window_bounds = array<i64: 1, 32>}, {pipeline_mode = #tpu.pipeline_mode<synchronous>, transform_indices = @transform_5, window_bounds = array<i64: 1, 32>}, {pipeline_mode = #tpu.pipeline_mode<synchronous>, transform_indices = @transform_6, window_bounds = array<i64: 1, 1>}, {transform_indices = @transform_7, window_bounds = array<i64: 2, 8>}, {pipeline_mode = #tpu.pipeline_mode<synchronous>, transform_indices = @transform_8, window_bounds = array<i64: 2, 32>}]} {
    %c0_i32 = arith.constant 0 : i32
    %0 = arith.cmpi eq, %arg0, %c0_i32 : i32
    %1 = arith.extui %0 : i1 to i32
    %c0_i32_0 = arith.constant 0 : i32
    %2 = arith.cmpi ne, %1, %c0_i32_0 : i32
    scf.if %2 {
      %c0_67 = arith.constant 0 : index
      %c0_68 = arith.constant 0 : index
      %111 = vector.load %arg2[%c0_67, %c0_68] : memref<2x32xf32, #tpu.memory_space<vmem>>, vector<2x32xf32>
      %c0_69 = arith.constant 0 : index
      %c0_70 = arith.constant 0 : index
      %112 = vector.load %arg11[%c0_69, %c0_70] : memref<2x32xf32, #tpu.memory_space<vmem>>, vector<2x32xf32>
      tpu.vector_store %arg11[%c0_69, %c0_70], %111 {strides = array<i32>} : memref<2x32xf32, #tpu.memory_space<vmem>>, vector<2x32xf32>,
    } else {
    }
    %c0 = arith.constant 0 : index
    %c0_1 = arith.constant 0 : index
    %3 = vector.load %arg3[%c0, %c0_1] : memref<1x32xf32, #tpu.memory_space<vmem>>, vector<1x32xf32>
    %c0_2 = arith.constant 0 : index
    %c0_3 = arith.constant 0 : index
    %4 = vector.load %arg5[%c0_2, %c0_3] : memref<1x32xf32, #tpu.memory_space<vmem>>, vector<1x32xf32>
    %c0_4 = arith.constant 0 : index
    %c0_5 = arith.constant 0 : index
    %5 = vector.load %arg1[%c0_4, %c0_5] : memref<2x8xf32, #tpu.memory_space<vmem>>, vector<2x8xf32>
    %6 = tpu.transpose %5, [1, 0] : vector<2x8xf32> -> vector<8x2xf32>
    %7 = vector.shape_cast %6 : vector<8x2xf32> to vector<8x2x1xf32>
    %8 = vector.shape_cast %3 : vector<1x32xf32> to vector<1x1x32xf32>
    %9 = vector.broadcast %7 : vector<8x2x1xf32> to vector<8x2x32xf32>
    %10 = vector.broadcast %8 : vector<1x1x32xf32> to vector<8x2x32xf32>
    %11 = arith.mulf %9, %10 : vector<8x2x32xf32>
    %12 = vector.shape_cast %4 : vector<1x32xf32> to vector<1x1x32xf32>
    %13 = vector.broadcast %12 : vector<1x1x32xf32> to vector<8x2x32xf32>
    %14 = arith.addf %11, %13 : vector<8x2x32xf32>
    %c0_6 = arith.constant 0 : index
    %c0_7 = arith.constant 0 : index
    %c0_8 = arith.constant 0 : index
    %15 = vector.load %arg10[%c0_6, %c0_7, %c0_8] : memref<8x2x32xf32, #tpu.memory_space<vmem>>, vector<8x2x32xf32>
    tpu.vector_store %arg10[%c0_6, %c0_7, %c0_8], %14 {strides = array<i32>} : memref<8x2x32xf32, #tpu.memory_space<vmem>>, vector<8x2x32xf32>,
    %c0_9 = arith.constant 0 : index
    %c0_10 = arith.constant 0 : index
    %16 = vector.load %arg4[%c0_9, %c0_10] : memref<32x32xf32, #tpu.memory_space<vmem>>, vector<32x32xf32>
    %c0_11 = arith.constant 0 : index
    %c0_12 = arith.constant 0 : index
    %17 = vector.load %arg11[%c0_11, %c0_12] : memref<2x32xf32, #tpu.memory_space<vmem>>, vector<2x32xf32>
    %c0_i32_13 = arith.constant 0 : i32
    %18 = arith.index_cast %c0_i32_13 : i32 to index
    %c0_14 = arith.constant 0 : index
    %c0_15 = arith.constant 0 : index
    %19 = vector.load %arg10[%18, %c0_14, %c0_15] : memref<8x2x32xf32, #tpu.memory_space<vmem>>, vector<1x2x32xf32>
    %20 = vector.shape_cast %19 : vector<1x2x32xf32> to vector<2x32xf32>
    %cst = arith.constant dense<0.000000e+00> : vector<2x32xf32>
    %21 = tpu.matmul %17, %16, %cst {dimension_numbers = #tpu.dot_dimension_numbers<[1], [0], [0], [1], [0, 0, 1, 1], [], []>} : vector<2x32xf32>, vector<32x32xf32>, vector<2x32xf32> -> vector<2x32xf32>
    %22 = arith.addf %20, %21 : vector<2x32xf32>
    %23 = math.tanh %22 : vector<2x32xf32>
    %24 = arith.index_cast %c0_i32_13 : i32 to index
    %c0_16 = arith.constant 0 : index
    %c0_17 = arith.constant 0 : index
    %25 = vector.load %arg10[%24, %c0_16, %c0_17] : memref<8x2x32xf32, #tpu.memory_space<vmem>>, vector<1x2x32xf32>
    %26 = vector.shape_cast %25 : vector<1x2x32xf32> to vector<2x32xf32>
    %27 = vector.shape_cast %23 : vector<2x32xf32> to vector<1x2x32xf32>
    tpu.vector_store %arg10[%24, %c0_16, %c0_17], %27 {strides = array<i32>} : memref<8x2x32xf32, #tpu.memory_space<vmem>>, vector<1x2x32xf32>,
    %c1_i32 = arith.constant 1 : i32
    %28 = arith.index_cast %c1_i32 : i32 to index
    %c0_18 = arith.constant 0 : index
    %c0_19 = arith.constant 0 : index
    %29 = vector.load %arg10[%28, %c0_18, %c0_19] : memref<8x2x32xf32, #tpu.memory_space<vmem>>, vector<1x2x32xf32>
    %30 = vector.shape_cast %29 : vector<1x2x32xf32> to vector<2x32xf32>
    %cst_20 = arith.constant dense<0.000000e+00> : vector<2x32xf32>
    %31 = tpu.matmul %23, %16, %cst_20 {dimension_numbers = #tpu.dot_dimension_numbers<[1], [0], [0], [1], [0, 0, 1, 1], [], []>} : vector<2x32xf32>, vector<32x32xf32>, vector<2x32xf32> -> vector<2x32xf32>
    %32 = arith.addf %30, %31 : vector<2x32xf32>
    %33 = math.tanh %32 : vector<2x32xf32>
    %34 = arith.index_cast %c1_i32 : i32 to index
    %c0_21 = arith.constant 0 : index
    %c0_22 = arith.constant 0 : index
    %35 = vector.load %arg10[%34, %c0_21, %c0_22] : memref<8x2x32xf32, #tpu.memory_space<vmem>>, vector<1x2x32xf32>
    %36 = vector.shape_cast %35 : vector<1x2x32xf32> to vector<2x32xf32>
    %37 = vector.shape_cast %33 : vector<2x32xf32> to vector<1x2x32xf32>
    tpu.vector_store %arg10[%34, %c0_21, %c0_22], %37 {strides = array<i32>} : memref<8x2x32xf32, #tpu.memory_space<vmem>>, vector<1x2x32xf32>,
    %c2_i32 = arith.constant 2 : i32
    %38 = arith.index_cast %c2_i32 : i32 to index
    %c0_23 = arith.constant 0 : index
    %c0_24 = arith.constant 0 : index
    %39 = vector.load %arg10[%38, %c0_23, %c0_24] : memref<8x2x32xf32, #tpu.memory_space<vmem>>, vector<1x2x32xf32>
    %40 = vector.shape_cast %39 : vector<1x2x32xf32> to vector<2x32xf32>
    %cst_25 = arith.constant dense<0.000000e+00> : vector<2x32xf32>
    %41 = tpu.matmul %33, %16, %cst_25 {dimension_numbers = #tpu.dot_dimension_numbers<[1], [0], [0], [1], [0, 0, 1, 1], [], []>} : vector<2x32xf32>, vector<32x32xf32>, vector<2x32xf32> -> vector<2x32xf32>
    %42 = arith.addf %40, %41 : vector<2x32xf32>
    %43 = math.tanh %42 : vector<2x32xf32>
    %44 = arith.index_cast %c2_i32 : i32 to index
    %c0_26 = arith.constant 0 : index
    %c0_27 = arith.constant 0 : index
    %45 = vector.load %arg10[%44, %c0_26, %c0_27] : memref<8x2x32xf32, #tpu.memory_space<vmem>>, vector<1x2x32xf32>
    %46 = vector.shape_cast %45 : vector<1x2x32xf32> to vector<2x32xf32>
    %47 = vector.shape_cast %43 : vector<2x32xf32> to vector<1x2x32xf32>
    tpu.vector_store %arg10[%44, %c0_26, %c0_27], %47 {strides = array<i32>} : memref<8x2x32xf32, #tpu.memory_space<vmem>>, vector<1x2x32xf32>,
    %c3_i32 = arith.constant 3 : i32
    %48 = arith.index_cast %c3_i32 : i32 to index
    %c0_28 = arith.constant 0 : index
    %c0_29 = arith.constant 0 : index
    %49 = vector.load %arg10[%48, %c0_28, %c0_29] : memref<8x2x32xf32, #tpu.memory_space<vmem>>, vector<1x2x32xf32>
    %50 = vector.shape_cast %49 : vector<1x2x32xf32> to vector<2x32xf32>
    %cst_30 = arith.constant dense<0.000000e+00> : vector<2x32xf32>
    %51 = tpu.matmul %43, %16, %cst_30 {dimension_numbers = #tpu.dot_dimension_numbers<[1], [0], [0], [1], [0, 0, 1, 1], [], []>} : vector<2x32xf32>, vector<32x32xf32>, vector<2x32xf32> -> vector<2x32xf32>
    %52 = arith.addf %50, %51 : vector<2x32xf32>
    %53 = math.tanh %52 : vector<2x32xf32>
    %54 = arith.index_cast %c3_i32 : i32 to index
    %c0_31 = arith.constant 0 : index
    %c0_32 = arith.constant 0 : index
    %55 = vector.load %arg10[%54, %c0_31, %c0_32] : memref<8x2x32xf32, #tpu.memory_space<vmem>>, vector<1x2x32xf32>
    %56 = vector.shape_cast %55 : vector<1x2x32xf32> to vector<2x32xf32>
    %57 = vector.shape_cast %53 : vector<2x32xf32> to vector<1x2x32xf32>
    tpu.vector_store %arg10[%54, %c0_31, %c0_32], %57 {strides = array<i32>} : memref<8x2x32xf32, #tpu.memory_space<vmem>>, vector<1x2x32xf32>,
    %c4_i32 = arith.constant 4 : i32
    %58 = arith.index_cast %c4_i32 : i32 to index
    %c0_33 = arith.constant 0 : index
    %c0_34 = arith.constant 0 : index
    %59 = vector.load %arg10[%58, %c0_33, %c0_34] : memref<8x2x32xf32, #tpu.memory_space<vmem>>, vector<1x2x32xf32>
    %60 = vector.shape_cast %59 : vector<1x2x32xf32> to vector<2x32xf32>
    %cst_35 = arith.constant dense<0.000000e+00> : vector<2x32xf32>
    %61 = tpu.matmul %53, %16, %cst_35 {dimension_numbers = #tpu.dot_dimension_numbers<[1], [0], [0], [1], [0, 0, 1, 1], [], []>} : vector<2x32xf32>, vector<32x32xf32>, vector<2x32xf32> -> vector<2x32xf32>
    %62 = arith.addf %60, %61 : vector<2x32xf32>
    %63 = math.tanh %62 : vector<2x32xf32>
    %64 = arith.index_cast %c4_i32 : i32 to index
    %c0_36 = arith.constant 0 : index
    %c0_37 = arith.constant 0 : index
    %65 = vector.load %arg10[%64, %c0_36, %c0_37] : memref<8x2x32xf32, #tpu.memory_space<vmem>>, vector<1x2x32xf32>
    %66 = vector.shape_cast %65 : vector<1x2x32xf32> to vector<2x32xf32>
    %67 = vector.shape_cast %63 : vector<2x32xf32> to vector<1x2x32xf32>
    tpu.vector_store %arg10[%64, %c0_36, %c0_37], %67 {strides = array<i32>} : memref<8x2x32xf32, #tpu.memory_space<vmem>>, vector<1x2x32xf32>,
    %c5_i32 = arith.constant 5 : i32
    %68 = arith.index_cast %c5_i32 : i32 to index
    %c0_38 = arith.constant 0 : index
    %c0_39 = arith.constant 0 : index
    %69 = vector.load %arg10[%68, %c0_38, %c0_39] : memref<8x2x32xf32, #tpu.memory_space<vmem>>, vector<1x2x32xf32>
    %70 = vector.shape_cast %69 : vector<1x2x32xf32> to vector<2x32xf32>
    %cst_40 = arith.constant dense<0.000000e+00> : vector<2x32xf32>
    %71 = tpu.matmul %63, %16, %cst_40 {dimension_numbers = #tpu.dot_dimension_numbers<[1], [0], [0], [1], [0, 0, 1, 1], [], []>} : vector<2x32xf32>, vector<32x32xf32>, vector<2x32xf32> -> vector<2x32xf32>
    %72 = arith.addf %70, %71 : vector<2x32xf32>
    %73 = math.tanh %72 : vector<2x32xf32>
    %74 = arith.index_cast %c5_i32 : i32 to index
    %c0_41 = arith.constant 0 : index
    %c0_42 = arith.constant 0 : index
    %75 = vector.load %arg10[%74, %c0_41, %c0_42] : memref<8x2x32xf32, #tpu.memory_space<vmem>>, vector<1x2x32xf32>
    %76 = vector.shape_cast %75 : vector<1x2x32xf32> to vector<2x32xf32>
    %77 = vector.shape_cast %73 : vector<2x32xf32> to vector<1x2x32xf32>
    tpu.vector_store %arg10[%74, %c0_41, %c0_42], %77 {strides = array<i32>} : memref<8x2x32xf32, #tpu.memory_space<vmem>>, vector<1x2x32xf32>,
    %c6_i32 = arith.constant 6 : i32
    %78 = arith.index_cast %c6_i32 : i32 to index
    %c0_43 = arith.constant 0 : index
    %c0_44 = arith.constant 0 : index
    %79 = vector.load %arg10[%78, %c0_43, %c0_44] : memref<8x2x32xf32, #tpu.memory_space<vmem>>, vector<1x2x32xf32>
    %80 = vector.shape_cast %79 : vector<1x2x32xf32> to vector<2x32xf32>
    %cst_45 = arith.constant dense<0.000000e+00> : vector<2x32xf32>
    %81 = tpu.matmul %73, %16, %cst_45 {dimension_numbers = #tpu.dot_dimension_numbers<[1], [0], [0], [1], [0, 0, 1, 1], [], []>} : vector<2x32xf32>, vector<32x32xf32>, vector<2x32xf32> -> vector<2x32xf32>
    %82 = arith.addf %80, %81 : vector<2x32xf32>
    %83 = math.tanh %82 : vector<2x32xf32>
    %84 = arith.index_cast %c6_i32 : i32 to index
    %c0_46 = arith.constant 0 : index
    %c0_47 = arith.constant 0 : index
    %85 = vector.load %arg10[%84, %c0_46, %c0_47] : memref<8x2x32xf32, #tpu.memory_space<vmem>>, vector<1x2x32xf32>
    %86 = vector.shape_cast %85 : vector<1x2x32xf32> to vector<2x32xf32>
    %87 = vector.shape_cast %83 : vector<2x32xf32> to vector<1x2x32xf32>
    tpu.vector_store %arg10[%84, %c0_46, %c0_47], %87 {strides = array<i32>} : memref<8x2x32xf32, #tpu.memory_space<vmem>>, vector<1x2x32xf32>,
    %c7_i32 = arith.constant 7 : i32
    %88 = arith.index_cast %c7_i32 : i32 to index
    %c0_48 = arith.constant 0 : index
    %c0_49 = arith.constant 0 : index
    %89 = vector.load %arg10[%88, %c0_48, %c0_49] : memref<8x2x32xf32, #tpu.memory_space<vmem>>, vector<1x2x32xf32>
    %90 = vector.shape_cast %89 : vector<1x2x32xf32> to vector<2x32xf32>
    %cst_50 = arith.constant dense<0.000000e+00> : vector<2x32xf32>
    %91 = tpu.matmul %83, %16, %cst_50 {dimension_numbers = #tpu.dot_dimension_numbers<[1], [0], [0], [1], [0, 0, 1, 1], [], []>} : vector<2x32xf32>, vector<32x32xf32>, vector<2x32xf32> -> vector<2x32xf32>
    %92 = arith.addf %90, %91 : vector<2x32xf32>
    %93 = math.tanh %92 : vector<2x32xf32>
    %94 = arith.index_cast %c7_i32 : i32 to index
    %c0_51 = arith.constant 0 : index
    %c0_52 = arith.constant 0 : index
    %95 = vector.load %arg10[%94, %c0_51, %c0_52] : memref<8x2x32xf32, #tpu.memory_space<vmem>>, vector<1x2x32xf32>
    %96 = vector.shape_cast %95 : vector<1x2x32xf32> to vector<2x32xf32>
    %97 = vector.shape_cast %93 : vector<2x32xf32> to vector<1x2x32xf32>
    tpu.vector_store %arg10[%94, %c0_51, %c0_52], %97 {strides = array<i32>} : memref<8x2x32xf32, #tpu.memory_space<vmem>>, vector<1x2x32xf32>,
    %c8_i32 = arith.constant 8 : i32
    %c0_53 = arith.constant 0 : index
    %c0_54 = arith.constant 0 : index
    %98 = vector.load %arg11[%c0_53, %c0_54] : memref<2x32xf32, #tpu.memory_space<vmem>>, vector<2x32xf32>
    tpu.vector_store %arg11[%c0_53, %c0_54], %93 {strides = array<i32>} : memref<2x32xf32, #tpu.memory_space<vmem>>, vector<2x32xf32>,
    %c0_55 = arith.constant 0 : index
    %c0_56 = arith.constant 0 : index
    %99 = vector.load %arg9[%c0_55, %c0_56] : memref<2x32xf32, #tpu.memory_space<vmem>>, vector<2x32xf32>
    tpu.vector_store %arg9[%c0_55, %c0_56], %93 {strides = array<i32>} : memref<2x32xf32, #tpu.memory_space<vmem>>, vector<2x32xf32>,
    %c0_57 = arith.constant 0 : index
    %c0_58 = arith.constant 0 : index
    %100 = vector.load %arg6[%c0_57, %c0_58] : memref<1x32xf32, #tpu.memory_space<vmem>>, vector<1x32xf32>
    %c0_59 = arith.constant 0 : index
    %c0_60 = arith.constant 0 : index
    %c0_61 = arith.constant 0 : index
    %101 = vector.load %arg10[%c0_59, %c0_60, %c0_61] : memref<8x2x32xf32, #tpu.memory_space<vmem>>, vector<8x2x32xf32>
    %102 = vector.shape_cast %100 : vector<1x32xf32> to vector<1x1x32xf32>
    %103 = vector.broadcast %102 : vector<1x1x32xf32> to vector<8x2x32xf32>
    %104 = arith.mulf %101, %103 : vector<8x2x32xf32>
    %cst_62 = arith.constant dense<0.000000e+00> : vector<8x2xf32>
    %105 = vector.multi_reduction <add>, %104, %cst_62 [2] : vector<8x2x32xf32> to vector<8x2xf32>
    %106 = tpu.transpose %105, [1, 0] : vector<8x2xf32> -> vector<2x8xf32>
    %c0_63 = arith.constant 0 : index
    %c0_64 = arith.constant 0 : index
    %107 = vector.load %arg7[%c0_63, %c0_64] : memref<1x1xf32, #tpu.memory_space<vmem>>, vector<1x1xf32>
    %108 = vector.broadcast %107 : vector<1x1xf32> to vector<2x8xf32>
    %109 = arith.addf %106, %108 : vector<2x8xf32>
    %c0_65 = arith.constant 0 : index
    %c0_66 = arith.constant 0 : index
    %110 = vector.load %arg8[%c0_65, %c0_66] : memref<2x8xf32, #tpu.memory_space<vmem>>, vector<2x8xf32>
    tpu.vector_store %arg8[%c0_65, %c0_66], %109 {strides = array<i32>} : memref<2x8xf32, #tpu.memory_space<vmem>>, vector<2x8xf32>,
    return
  }
  func.func @transform_0(%arg0: i32) -> (i32, i32) {
    %c0_i32 = arith.constant 0 : i32
    %c0_i32_0 = arith.constant 0 : i32
    return %c0_i32, %arg0 : i32, i32
  }
  func.func @transform_1(%arg0: i32) -> (i32, i32) {
    %c0_i32 = arith.constant 0 : i32
    %c0_i32_0 = arith.constant 0 : i32
    %c0_i32_1 = arith.constant 0 : i32
    return %c0_i32, %c0_i32_0 : i32, i32
  }
  func.func @transform_2(%arg0: i32) -> (i32, i32) {
    %c0_i32 = arith.constant 0 : i32
    %c0_i32_0 = arith.constant 0 : i32
    %c0_i32_1 = arith.constant 0 : i32
    return %c0_i32, %c0_i32_0 : i32, i32
  }
  func.func @transform_3(%arg0: i32) -> (i32, i32) {
    %c0_i32 = arith.constant 0 : i32
    %c0_i32_0 = arith.constant 0 : i32
    %c0_i32_1 = arith.constant 0 : i32
    return %c0_i32, %c0_i32_0 : i32, i32
  }
  func.func @transform_4(%arg0: i32) -> (i32, i32) {
    %c0_i32 = arith.constant 0 : i32
    %c0_i32_0 = arith.constant 0 : i32
    %c0_i32_1 = arith.constant 0 : i32
    return %c0_i32, %c0_i32_0 : i32, i32
  }
  func.func @transform_5(%arg0: i32) -> (i32, i32) {
    %c0_i32 = arith.constant 0 : i32
    %c0_i32_0 = arith.constant 0 : i32
    %c0_i32_1 = arith.constant 0 : i32
    return %c0_i32, %c0_i32_0 : i32, i32
  }
  func.func @transform_6(%arg0: i32) -> (i32, i32) {
    %c0_i32 = arith.constant 0 : i32
    %c0_i32_0 = arith.constant 0 : i32
    %c0_i32_1 = arith.constant 0 : i32
    return %c0_i32, %c0_i32_0 : i32, i32
  }
  func.func @transform_7(%arg0: i32) -> (i32, i32) {
    %c0_i32 = arith.constant 0 : i32
    %c0_i32_0 = arith.constant 0 : i32
    return %c0_i32, %arg0 : i32, i32
  }
  func.func @transform_8(%arg0: i32) -> (i32, i32) {
    %c0_i32 = arith.constant 0 : i32
    %c0_i32_0 = arith.constant 0 : i32
    %c0_i32_1 = arith.constant 0 : i32
    return %c0_i32, %c0_i32_0 : i32, i32
  }
}

</mosaic_0001>

<llo_original>
// kernel: tpu_custom_call.1
$region0: #{tpu_custom_call.1}
  #allocation0 [shape = 'u32[]', space=smem, size = 0x4, offset = 0x4, fixed_abs, tag = 'smem constant byte address 0x4 - core index']
  #allocation1 [shape = 'u32[144,128]{1,0:T(1,128)}', space=vmem, size = 0x12000, scoped, tag = 'internal scratch']
  #allocation2 [shape = 'f32[8,2,32]{2,1,0:T(2,128)}', space=vmem, size = 0x2000, scoped, tag = 'scratch operand']
  #allocation3 [shape = 'f32[2,32]{1,0:T(2,128)}', space=vmem, size = 0x400, scoped, tag = 'scratch operand']
  #allocation4 [shape = 'f32[1,1]{1,0:T(1,128)S(1)}', space=vmem, size = 0x200, scoped, tag = 'scoped memory for tpu_custom_call.1']
  %s0 = inlined_call_operand.vmem [shape: f32[2,8], index: 0, kind: input, shape index: {}]
  %s1 = inlined_call_operand.hbm [shape: f32[2,32], index: 1, kind: input, shape index: {}]
  %s2 = inlined_call_operand.vmem [shape: f32[1,32], index: 2, kind: input, shape index: {}]
  %s3 = inlined_call_operand.hbm [shape: f32[32,32], index: 3, kind: input, shape index: {}]
  %s4 = inlined_call_operand.vmem [shape: f32[1,32], index: 4, kind: input, shape index: {}]
  %s5 = inlined_call_operand.vmem [shape: f32[1,32], index: 5, kind: input, shape index: {}]
  %s6 = inlined_call_operand.<no memory space> [shape: f32[1,1], index: 6, kind: input, shape index: {}]
  %s7 = inlined_call_operand.hbm [shape: f32[2,8], index: 7, kind: output, shape index: {0}]
  %s8 = inlined_call_operand.hbm [shape: f32[2,32], index: 8, kind: output, shape index: {1}]
  %9 = xla_tuple %s7, %s8
  %s10 = sld [smem:[#allocation0]]
  $region58: #{tpu_custom_call.1} parent=0
    _
  %s12 = ssub.s32 1, %s10
  %s13 = scalar_select 0, %s12, %s10
  %v14 = vstv %s6
  %15 = vst [vmem:[#allocation4] sm:$0x1] %v14
  $region1: #{tpu_custom_call.1} parent=0
    #allocation5 [shape = 'u8[1024]{0}', space=vmem, size = 0x400, scoped, tag = 'input window, operand 1, single buffered']
    #allocation6 [shape = 's32[1]{0}', space=sflag, size = 0x4, scoped, tag = 'scoped memory for tpu_custom_call.1']
    #allocation7 [shape = 's32[1]{0}', space=sflag, size = 0x4, scoped, tag = 'scoped memory for tpu_custom_call.1']
    #allocation8 [shape = 'u8[16384]{0}', space=vmem, size = 0x4000, scoped, tag = 'input window, operand 3, single buffered']
    #allocation9 [shape = 's32[1]{0}', space=sflag, size = 0x4, scoped, tag = 'scoped memory for tpu_custom_call.1']
    #allocation10 [shape = 'u8[1024]{0}', space=vmem, size = 0x400, scoped, tag = 'output window, operand 0, single buffered']
    #allocation11 [shape = 'u8[1024]{0}', space=vmem, size = 0x400, scoped, tag = 'output window, operand 1, single buffered']
    #allocation12 [shape = 's32[1]{0}', space=sflag, size = 0x4, scoped, tag = 'scoped memory for tpu_custom_call.1']
    %16 = vsyncpa [#allocation6], 0
    %17 = vsyncpa [#allocation9], 0
    %18 = vsyncpa [#allocation7], 0
    %19 = vsyncpa [#allocation12], 0
    // Predicated region
    $region2: #{tpu_custom_call.1} parent=1 // pred_check
      _
    $region3: #{tpu_custom_call.1} parent=1 // pred_check_branch
      %21 = sbr.rel (0) target = $region5
    $region4: #{tpu_custom_call.1} parent=1 // pred_region
      _
    $region5: #{tpu_custom_call.1} parent=1 // pred_fallthru
      _
    // Predicated region
    $region6: #{tpu_custom_call.1} parent=1 // pred_check
      _
    $region7: #{tpu_custom_call.1} parent=1 // pred_check_branch
      %23 = sbr.rel (0) target = $region9
    $region8: #{tpu_custom_call.1} parent=1 // pred_region
      %s25 = ssub.s32 32, 32
      %26 = vsyncadd [#allocation6], %s25
      %s28 = sshll.u32 [#allocation5], 4
      %s29 = int_to_ptr.vmem [resolvable:$true] %s28
      %31 = dma.hbm_to_vmem [thread:$0]  %s1, 32, %s29, [#allocation6]
    $region9: #{tpu_custom_call.1} parent=1 // pred_fallthru
      _
    // Predicated region
    $region10: #{tpu_custom_call.1} parent=1 // pred_check
      _
    $region11: #{tpu_custom_call.1} parent=1 // pred_check_branch
      %33 = sbr.rel (0) target = $region13
    $region12: #{tpu_custom_call.1} parent=1 // pred_region
      _
    $region13: #{tpu_custom_call.1} parent=1 // pred_fallthru
      _
    // Predicated region
    $region14: #{tpu_custom_call.1} parent=1 // pred_check
      _
    $region15: #{tpu_custom_call.1} parent=1 // pred_check_branch
      %35 = sbr.rel (0) target = $region17
    $region16: #{tpu_custom_call.1} parent=1 // pred_region
      %s37 = ssub.s32 512, 512
      %38 = vsyncadd [#allocation9], %s37
      %s39 = sshll.u32 [#allocation8], 4
      %s40 = int_to_ptr.vmem [resolvable:$true] %s39
      %45 = dma.hbm_to_vmem [thread:$0]  %s3, 512, %s40, [#allocation9], 128, 128, 8
    $region17: #{tpu_custom_call.1} parent=1 // pred_fallthru
      _
    // Predicated region
    $region18: #{tpu_custom_call.1} parent=1 // pred_check
      _
    $region19: #{tpu_custom_call.1} parent=1 // pred_check_branch
      %47 = sbr.rel (0) target = $region21
    $region20: #{tpu_custom_call.1} parent=1 // pred_region
      _
    $region21: #{tpu_custom_call.1} parent=1 // pred_fallthru
      _
    // Predicated region
    $region22: #{tpu_custom_call.1} parent=1 // pred_check
      _
    $region23: #{tpu_custom_call.1} parent=1 // pred_check_branch
      %49 = sbr.rel (0) target = $region25
    $region24: #{tpu_custom_call.1} parent=1 // pred_region
      _
    $region25: #{tpu_custom_call.1} parent=1 // pred_fallthru
      _
    // Predicated region
    $region26: #{tpu_custom_call.1} parent=1 // pred_check
      _
    $region27: #{tpu_custom_call.1} parent=1 // pred_check_branch
      %51 = sbr.rel (0) target = $region29
    $region28: #{tpu_custom_call.1} parent=1 // pred_region
      _
    $region29: #{tpu_custom_call.1} parent=1 // pred_fallthru
      _
    // Predicated region
    $region30: #{tpu_custom_call.1} parent=1 // pred_check
      _
    $region31: #{tpu_custom_call.1} parent=1 // pred_check_branch
      %53 = sbr.rel (0) target = $region33
    $region32: #{tpu_custom_call.1} parent=1 // pred_region
      %54 = dma.done [#allocation6], 32
    $region33: #{tpu_custom_call.1} parent=1 // pred_fallthru
      _
    // Predicated region
    $region34: #{tpu_custom_call.1} parent=1 // pred_check
      _
    $region35: #{tpu_custom_call.1} parent=1 // pred_check_branch
      %56 = sbr.rel (0) target = $region37
    $region36: #{tpu_custom_call.1} parent=1 // pred_region
      %57 = dma.done [#allocation9], 512
    $region37: #{tpu_custom_call.1} parent=1 // pred_fallthru
      _
    %p58 = scmp.eq.s32.totalorder 0, 0
    // Predicated region
    $region38: #{tpu_custom_call.1} parent=1 // pred_check
      %p59 = pneg %p58
    $region39: #{tpu_custom_call.1} parent=1 // pred_check_branch
      %61 = sbr.rel (%p59) target = $region41
    $region40: #{tpu_custom_call.1} parent=1 // pred_region
      %v62 = vld [vmem:[#allocation5] sm:$0x3]
      %vm63 = vcmask 254976
      %64 = vst.msk [vmem:[#allocation3] sm:$0x3] %vm63, %v62
    $region41: #{tpu_custom_call.1} parent=1 // pred_fallthru
      _
    %v65 = vld [vmem:[%s2] sm:$0x1]
    %v66 = vld [vmem:[%s4] sm:$0x1]
    %v67 = vld [vmem:[%s0] sm:$0x3]
    %68 = vxpose.xlu0.b32.start [1/16] %v67, 128
    %69 = vxpose.xlu0.b32.cont [2/16] 0.0, 128
    %70 = vxpose.xlu0.b32.cont [3/16] 0.0, 128
    %71 = vxpose.xlu0.b32.cont [4/16] 0.0, 128
    %72 = vxpose.xlu0.b32.cont [5/16] 0.0, 128
    %73 = vxpose.xlu0.b32.cont [6/16] 0.0, 128
    %74 = vxpose.xlu0.b32.cont [7/16] 0.0, 128
    %75 = vxpose.xlu0.b32.cont [8/16] 0.0, 128
    %76 = vxpose.xlu0.b32.cont [9/16] 0.0, 128
    %77 = vxpose.xlu0.b32.cont [10/16] 0.0, 128
    %78 = vxpose.xlu0.b32.cont [11/16] 0.0, 128
    %79 = vxpose.xlu0.b32.cont [12/16] 0.0, 128
    %80 = vxpose.xlu0.b32.cont [13/16] 0.0, 128
    %81 = vxpose.xlu0.b32.cont [14/16] 0.0, 128
    %82 = vxpose.xlu0.b32.cont [15/16] 0.0, 128
    %83 = vxpose.xlu0.b32.end [16/16] 0.0, 128
    %v84 = vpop.trf.xlu0
    %v85 = vpop.trf.xlu0
    %v86 = vpop.trf.xlu0
    %v87 = vpop.trf.xlu0
    %v88 = vpop.trf.xlu0
    %v89 = vpop.trf.xlu0
    %v90 = vpop.trf.xlu0
    %v91 = vpop.trf.xlu0
    %v92 = vpop.trf.xlu0
    %v93 = vpop.trf.xlu0
    %v94 = vpop.trf.xlu0
    %v95 = vpop.trf.xlu0
    %v96 = vpop.trf.xlu0
    %v97 = vpop.trf.xlu0
    %v98 = vpop.trf.xlu0
    %v99 = vpop.trf.xlu0
    %v100 = vlaneseq
    %v101 = vshrl.u32 %v100, 7
    %v102 = vsub.s32 0, %v101
    %v103 = vrot.slane %v84, %v102
    %105 = vbcast.lane.b32.xlu0 %v103, 256
    %v106 = vpop.permute.xlu0 %105
    %v107 = vlaneseq
    %v108 = vshrl.u32 %v107, 7
    %v109 = vsub.s32 1, %v108
    %v110 = vrot.slane %v84, %v109
    %112 = vbcast.lane.b32.xlu0 %v110, 256
    %v113 = vpop.permute.xlu0 %112
    %v114 = vlaneseq
    %v115 = vshrl.u32 %v114, 7
    %v116 = vsub.s32 2, %v115
    %v117 = vrot.slane %v84, %v116
    %119 = vbcast.lane.b32.xlu0 %v117, 256
    %v120 = vpop.permute.xlu0 %119
    %v121 = vlaneseq
    %v122 = vshrl.u32 %v121, 7
    %v123 = vsub.s32 3, %v122
    %v124 = vrot.slane %v84, %v123
    %126 = vbcast.lane.b32.xlu0 %v124, 256
    %v127 = vpop.permute.xlu0 %126
    %v128 = vlaneseq
    %v129 = vshrl.u32 %v128, 7
    %v130 = vsub.s32 4, %v129
    %v131 = vrot.slane %v84, %v130
    %133 = vbcast.lane.b32.xlu0 %v131, 256
    %v134 = vpop.permute.xlu0 %133
    %v135 = vlaneseq
    %v136 = vshrl.u32 %v135, 7
    %v137 = vsub.s32 5, %v136
    %v138 = vrot.slane %v84, %v137
    %140 = vbcast.lane.b32.xlu0 %v138, 256
    %v141 = vpop.permute.xlu0 %140
    %v142 = vlaneseq
    %v143 = vshrl.u32 %v142, 7
    %v144 = vsub.s32 6, %v143
    %v145 = vrot.slane %v84, %v144
    %147 = vbcast.lane.b32.xlu0 %v145, 256
    %v148 = vpop.permute.xlu0 %147
    %v149 = vlaneseq
    %v150 = vshrl.u32 %v149, 7
    %v151 = vsub.s32 7, %v150
    %v152 = vrot.slane %v84, %v151
    %154 = vbcast.lane.b32.xlu0 %v152, 256
    %v155 = vpop.permute.xlu0 %154
    %v157 = vlaneseq
    %v158 = vshrl.u32 %v157, 7
    %v159 = vsub.s32 0, %v158
    %v160 = vrot.slane %v65, %v159
    %v162 = vmul.f32 %v106, %v160
    %v163 = vmul.f32 %v113, %v160
    %v164 = vmul.f32 %v120, %v160
    %v165 = vmul.f32 %v127, %v160
    %v166 = vmul.f32 %v134, %v160
    %v167 = vmul.f32 %v141, %v160
    %v168 = vmul.f32 %v148, %v160
    %v169 = vmul.f32 %v155, %v160
    %v171 = vlaneseq
    %v172 = vshrl.u32 %v171, 7
    %v173 = vsub.s32 0, %v172
    %v174 = vrot.slane %v66, %v173
    %v176 = vadd.f32 %v162, %v174
    %v177 = vadd.f32 %v163, %v174
    %v178 = vadd.f32 %v164, %v174
    %v179 = vadd.f32 %v165, %v174
    %v180 = vadd.f32 %v166, %v174
    %v181 = vadd.f32 %v167, %v174
    %v182 = vadd.f32 %v168, %v174
    %v183 = vadd.f32 %v169, %v174
    %vm184 = vcmask 254976
    %185 = vst.msk [vmem:[#allocation2] sm:$0x3] %vm184, %v176
    %186 = vst.msk [vmem:[#allocation2 + $0x2] sm:$0x3] %vm184, %v177
    %187 = vst.msk [vmem:[#allocation2 + $0x4] sm:$0x3] %vm184, %v178
    %188 = vst.msk [vmem:[#allocation2 + $0x6] sm:$0x3] %vm184, %v179
    %189 = vst.msk [vmem:[#allocation2 + $0x8] sm:$0x3] %vm184, %v180
    %190 = vst.msk [vmem:[#allocation2 + $0xa] sm:$0x3] %vm184, %v181
    %191 = vst.msk [vmem:[#allocation2 + $0xc] sm:$0x3] %vm184, %v182
    %192 = vst.msk [vmem:[#allocation2 + $0xe] sm:$0x3] %vm184, %v183
    %v193 = vld [vmem:[#allocation8] sm:$0xff]
    %v194 = vld [vmem:[#allocation8 + $0x8] sm:$0xff]
    %v195 = vld [vmem:[#allocation8 + $0x10] sm:$0xff]
    %v196 = vld [vmem:[#allocation8 + $0x18] sm:$0xff]
    %v197 = vld [vmem:[#allocation3] sm:$0x3]
    %v198 = vld [vmem:[#allocation2] sm:$0x3]
    %vm199 = vcmask 261120
    %v201 = vsel %vm199, %v197, 0
    %203 = vmatprep.subr.mxu0 0.0
    %204 = vmatpush1.msra.mxu0 0.0
    %205 = vmatprep.subr.mxu0 0.0
    %206 = vmatpush1.msra.mxu0 0.0
    %207 = vmatprep.subr.mxu0 0.0
    %208 = vmatpush1.msra.mxu0 0.0
    %209 = vmatprep.subr.mxu0 0.0
    %210 = vmatpush1.msra.mxu0 0.0
    %211 = vmatprep.subr.mxu0 0.0
    %212 = vmatpush1.msra.mxu0 0.0
    %213 = vmatprep.subr.mxu0 0.0
    %214 = vmatpush1.msra.mxu0 0.0
    %215 = vmatprep.subr.mxu0 0.0
    %216 = vmatpush1.msra.mxu0 0.0
    %217 = vmatprep.subr.mxu0 0.0
    %218 = vmatpush1.msra.mxu0 0.0
    %219 = vmatprep.subr.mxu0 0.0
    %220 = vmatpush1.msra.mxu0 0.0
    %221 = vmatprep.subr.mxu0 0.0
    %222 = vmatpush1.msra.mxu0 0.0
    %223 = vmatprep.subr.mxu0 0.0
    %224 = vmatpush1.msra.mxu0 0.0
    %225 = vmatprep.subr.mxu0 0.0
    %226 = vmatpush1.msra.mxu0 0.0
    %227 = vmatprep.subr.mxu0 0.0
    %228 = vmatpush1.msra.mxu0 %v196
    %229 = vmatprep.subr.mxu0 0.0
    %230 = vmatpush1.msra.mxu0 %v195
    %231 = vmatprep.subr.mxu0 0.0
    %232 = vmatpush1.msra.mxu0 %v194
    %233 = vmatprep.subr.mxu0 0.0
    %234 = vmatpush1.msra.mxu0 %v193
    %235 = vmatprep.subr.mxu0 0.0
    %236 = vmatpush2.msra.mxu0 0.0
    %237 = vmatprep.subr.mxu0 0.0
    %238 = vmatpush2.msra.mxu0 0.0
    %239 = vmatprep.subr.mxu0 0.0
    %240 = vmatpush2.msra.mxu0 0.0
    %241 = vmatprep.subr.mxu0 0.0
    %242 = vmatpush2.msra.mxu0 0.0
    %243 = vmatprep.subr.mxu0 0.0
    %244 = vmatpush2.msra.mxu0 0.0
    %245 = vmatprep.subr.mxu0 0.0
    %246 = vmatpush2.msra.mxu0 0.0
    %247 = vmatprep.subr.mxu0 0.0
    %248 = vmatpush2.msra.mxu0 0.0
    %249 = vmatprep.subr.mxu0 0.0
    %250 = vmatpush2.msra.mxu0 0.0
    %251 = vmatprep.subr.mxu0 0.0
    %252 = vmatpush2.msra.mxu0 0.0
    %253 = vmatprep.subr.mxu0 0.0
    %254 = vmatpush2.msra.mxu0 0.0
    %255 = vmatprep.subr.mxu0 0.0
    %256 = vmatpush2.msra.mxu0 0.0
    %257 = vmatprep.subr.mxu0 0.0
    %258 = vmatpush2.msra.mxu0 0.0
    %259 = vmatprep.subr.mxu0 0.0
    %260 = vmatpush2.msra.mxu0 0.0
    %261 = vmatprep.subr.mxu0 0.0
    %262 = vmatpush2.msra.mxu0 0.0
    %263 = vmatprep.subr.mxu0 0.0
    %264 = vmatpush2.msra.mxu0 0.0
    %265 = vmatprep.subr.mxu0 0.0
    %266 = vmatpush2.msra.mxu0 0.0
    %267 = vmatprep.mubr.f32.mxu0 0.0
    %268 = vmatmul.mubr.f32.gmra.mxu0 %v201
    %v269 = vpop.f32.mrf.mxu0
    %v270 = vadd.f32 0.0, %v269
    %v271 = vpop.f32.mrf.mxu0
    %272 = vdwg.mxu0
    %v273 = vadd.f32 %v198, %v270
    %v274 = vtanh.pop %v273
    %275 = vst.msk [vmem:[#allocation2] sm:$0x3] %vm184, %v274
    %s276 = scalar_lea.vmem [#allocation2], 2
    %v277 = vld [vmem:[%s276] sm:$0x3]
    %v279 = vsel %vm199, %v274, 0
    %281 = vmatprep.subr.mxu0 0.0
    %282 = vmatpush1.msra.mxu0 0.0
    %283 = vmatprep.subr.mxu0 0.0
    %284 = vmatpush1.msra.mxu0 0.0
    %285 = vmatprep.subr.mxu0 0.0
    %286 = vmatpush1.msra.mxu0 0.0
    %287 = vmatprep.subr.mxu0 0.0
    %288 = vmatpush1.msra.mxu0 0.0
    %289 = vmatprep.subr.mxu0 0.0
    %290 = vmatpush1.msra.mxu0 0.0
    %291 = vmatprep.subr.mxu0 0.0
    %292 = vmatpush1.msra.mxu0 0.0
    %293 = vmatprep.subr.mxu0 0.0
    %294 = vmatpush1.msra.mxu0 0.0
    %295 = vmatprep.subr.mxu0 0.0
    %296 = vmatpush1.msra.mxu0 0.0
    %297 = vmatprep.subr.mxu0 0.0
    %298 = vmatpush1.msra.mxu0 0.0
    %299 = vmatprep.subr.mxu0 0.0
    %300 = vmatpush1.msra.mxu0 0.0
    %301 = vmatprep.subr.mxu0 0.0
    %302 = vmatpush1.msra.mxu0 0.0
    %303 = vmatprep.subr.mxu0 0.0
    %304 = vmatpush1.msra.mxu0 0.0
    %305 = vmatprep.subr.mxu0 0.0
    %306 = vmatpush1.msra.mxu0 %v196
    %307 = vmatprep.subr.mxu0 0.0
    %308 = vmatpush1.msra.mxu0 %v195
    %309 = vmatprep.subr.mxu0 0.0
    %310 = vmatpush1.msra.mxu0 %v194
    %311 = vmatprep.subr.mxu0 0.0
    %312 = vmatpush1.msra.mxu0 %v193
    %313 = vmatprep.subr.mxu0 0.0
    %314 = vmatpush2.msra.mxu0 0.0
    %315 = vmatprep.subr.mxu0 0.0
    %316 = vmatpush2.msra.mxu0 0.0
    %317 = vmatprep.subr.mxu0 0.0
    %318 = vmatpush2.msra.mxu0 0.0
    %319 = vmatprep.subr.mxu0 0.0
    %320 = vmatpush2.msra.mxu0 0.0
    %321 = vmatprep.subr.mxu0 0.0
    %322 = vmatpush2.msra.mxu0 0.0
    %323 = vmatprep.subr.mxu0 0.0
    %324 = vmatpush2.msra.mxu0 0.0
    %325 = vmatprep.subr.mxu0 0.0
    %326 = vmatpush2.msra.mxu0 0.0
    %327 = vmatprep.subr.mxu0 0.0
    %328 = vmatpush2.msra.mxu0 0.0
    %329 = vmatprep.subr.mxu0 0.0
    %330 = vmatpush2.msra.mxu0 0.0
    %331 = vmatprep.subr.mxu0 0.0
    %332 = vmatpush2.msra.mxu0 0.0
    %333 = vmatprep.subr.mxu0 0.0
    %334 = vmatpush2.msra.mxu0 0.0
    %335 = vmatprep.subr.mxu0 0.0
    %336 = vmatpush2.msra.mxu0 0.0
    %337 = vmatprep.subr.mxu0 0.0
    %338 = vmatpush2.msra.mxu0 0.0
    %339 = vmatprep.subr.mxu0 0.0
    %340 = vmatpush2.msra.mxu0 0.0
    %341 = vmatprep.subr.mxu0 0.0
    %342 = vmatpush2.msra.mxu0 0.0
    %343 = vmatprep.subr.mxu0 0.0
    %344 = vmatpush2.msra.mxu0 0.0
    %345 = vmatprep.mubr.f32.mxu0 0.0
    %346 = vmatmul.mubr.f32.gmra.mxu0 %v279
    %v347 = vpop.f32.mrf.mxu0
    %v348 = vadd.f32 0.0, %v347
    %v349 = vpop.f32.mrf.mxu0
    %350 = vdwg.mxu0
    %v351 = vadd.f32 %v277, %v348
    %v352 = vtanh.pop %v351
    %353 = vst.msk [vmem:[%s276] sm:$0x3] %vm184, %v352
    %s354 = scalar_lea.vmem [#allocation2], 4
    %v355 = vld [vmem:[%s354] sm:$0x3]
    %v357 = vsel %vm199, %v352, 0
    %359 = vmatprep.subr.mxu0 0.0
    %360 = vmatpush1.msra.mxu0 0.0
    %361 = vmatprep.subr.mxu0 0.0
    %362 = vmatpush1.msra.mxu0 0.0
    %363 = vmatprep.subr.mxu0 0.0
    %364 = vmatpush1.msra.mxu0 0.0
    %365 = vmatprep.subr.mxu0 0.0
    %366 = vmatpush1.msra.mxu0 0.0
    %367 = vmatprep.subr.mxu0 0.0
    %368 = vmatpush1.msra.mxu0 0.0
    %369 = vmatprep.subr.mxu0 0.0
    %370 = vmatpush1.msra.mxu0 0.0
    %371 = vmatprep.subr.mxu0 0.0
    %372 = vmatpush1.msra.mxu0 0.0
    %373 = vmatprep.subr.mxu0 0.0
    %374 = vmatpush1.msra.mxu0 0.0
    %375 = vmatprep.subr.mxu0 0.0
    %376 = vmatpush1.msra.mxu0 0.0
    %377 = vmatprep.subr.mxu0 0.0
    %378 = vmatpush1.msra.mxu0 0.0
    %379 = vmatprep.subr.mxu0 0.0
    %380 = vmatpush1.msra.mxu0 0.0
    %381 = vmatprep.subr.mxu0 0.0
    %382 = vmatpush1.msra.mxu0 0.0
    %383 = vmatprep.subr.mxu0 0.0
    %384 = vmatpush1.msra.mxu0 %v196
    %385 = vmatprep.subr.mxu0 0.0
    %386 = vmatpush1.msra.mxu0 %v195
    %387 = vmatprep.subr.mxu0 0.0
    %388 = vmatpush1.msra.mxu0 %v194
    %389 = vmatprep.subr.mxu0 0.0
    %390 = vmatpush1.msra.mxu0 %v193
    %391 = vmatprep.subr.mxu0 0.0
    %392 = vmatpush2.msra.mxu0 0.0
    %393 = vmatprep.subr.mxu0 0.0
    %394 = vmatpush2.msra.mxu0 0.0
    %395 = vmatprep.subr.mxu0 0.0
    %396 = vmatpush2.msra.mxu0 0.0
    %397 = vmatprep.subr.mxu0 0.0
    %398 = vmatpush2.msra.mxu0 0.0
    %399 = vmatprep.subr.mxu0 0.0
    %400 = vmatpush2.msra.mxu0 0.0
    %401 = vmatprep.subr.mxu0 0.0
    %402 = vmatpush2.msra.mxu0 0.0
    %403 = vmatprep.subr.mxu0 0.0
    %404 = vmatpush2.msra.mxu0 0.0
    %405 = vmatprep.subr.mxu0 0.0
    %406 = vmatpush2.msra.mxu0 0.0
    %407 = vmatprep.subr.mxu0 0.0
    %408 = vmatpush2.msra.mxu0 0.0
    %409 = vmatprep.subr.mxu0 0.0
    %410 = vmatpush2.msra.mxu0 0.0
    %411 = vmatprep.subr.mxu0 0.0
    %412 = vmatpush2.msra.mxu0 0.0
    %413 = vmatprep.subr.mxu0 0.0
    %414 = vmatpush2.msra.mxu0 0.0
    %415 = vmatprep.subr.mxu0 0.0
    %416 = vmatpush2.msra.mxu0 0.0
    %417 = vmatprep.subr.mxu0 0.0
    %418 = vmatpush2.msra.mxu0 0.0
    %419 = vmatprep.subr.mxu0 0.0
    %420 = vmatpush2.msra.mxu0 0.0
    %421 = vmatprep.subr.mxu0 0.0
    %422 = vmatpush2.msra.mxu0 0.0
    %423 = vmatprep.mubr.f32.mxu0 0.0
    %424 = vmatmul.mubr.f32.gmra.mxu0 %v357
    %v425 = vpop.f32.mrf.mxu0
    %v426 = vadd.f32 0.0, %v425
    %v427 = vpop.f32.mrf.mxu0
    %428 = vdwg.mxu0
    %v429 = vadd.f32 %v355, %v426
    %v430 = vtanh.pop %v429
    %431 = vst.msk [vmem:[%s354] sm:$0x3] %vm184, %v430
    %s432 = scalar_lea.vmem [#allocation2], 6
    %v433 = vld [vmem:[%s432] sm:$0x3]
    %v435 = vsel %vm199, %v430, 0
    %437 = vmatprep.subr.mxu0 0.0
    %438 = vmatpush1.msra.mxu0 0.0
    %439 = vmatprep.subr.mxu0 0.0
    %440 = vmatpush1.msra.mxu0 0.0
    %441 = vmatprep.subr.mxu0 0.0
    %442 = vmatpush1.msra.mxu0 0.0
    %443 = vmatprep.subr.mxu0 0.0
    %444 = vmatpush1.msra.mxu0 0.0
    %445 = vmatprep.subr.mxu0 0.0
    %446 = vmatpush1.msra.mxu0 0.0
    %447 = vmatprep.subr.mxu0 0.0
    %448 = vmatpush1.msra.mxu0 0.0
    %449 = vmatprep.subr.mxu0 0.0
    %450 = vmatpush1.msra.mxu0 0.0
    %451 = vmatprep.subr.mxu0 0.0
    %452 = vmatpush1.msra.mxu0 0.0
    %453 = vmatprep.subr.mxu0 0.0
    %454 = vmatpush1.msra.mxu0 0.0
    %455 = vmatprep.subr.mxu0 0.0
    %456 = vmatpush1.msra.mxu0 0.0
    %457 = vmatprep.subr.mxu0 0.0
    %458 = vmatpush1.msra.mxu0 0.0
    %459 = vmatprep.subr.mxu0 0.0
    %460 = vmatpush1.msra.mxu0 0.0
    %461 = vmatprep.subr.mxu0 0.0
    %462 = vmatpush1.msra.mxu0 %v196
    %463 = vmatprep.subr.mxu0 0.0
    %464 = vmatpush1.msra.mxu0 %v195
    %465 = vmatprep.subr.mxu0 0.0
    %466 = vmatpush1.msra.mxu0 %v194
    %467 = vmatprep.subr.mxu0 0.0
    %468 = vmatpush1.msra.mxu0 %v193
    %469 = vmatprep.subr.mxu0 0.0
    %470 = vmatpush2.msra.mxu0 0.0
    %471 = vmatprep.subr.mxu0 0.0
    %472 = vmatpush2.msra.mxu0 0.0
    %473 = vmatprep.subr.mxu0 0.0
    %474 = vmatpush2.msra.mxu0 0.0
    %475 = vmatprep.subr.mxu0 0.0
    %476 = vmatpush2.msra.mxu0 0.0
    %477 = vmatprep.subr.mxu0 0.0
    %478 = vmatpush2.msra.mxu0 0.0
    %479 = vmatprep.subr.mxu0 0.0
    %480 = vmatpush2.msra.mxu0 0.0
    %481 = vmatprep.subr.mxu0 0.0
    %482 = vmatpush2.msra.mxu0 0.0
    %483 = vmatprep.subr.mxu0 0.0
    %484 = vmatpush2.msra.mxu0 0.0
    %485 = vmatprep.subr.mxu0 0.0
    %486 = vmatpush2.msra.mxu0 0.0
    %487 = vmatprep.subr.mxu0 0.0
    %488 = vmatpush2.msra.mxu0 0.0
    %489 = vmatprep.subr.mxu0 0.0
    %490 = vmatpush2.msra.mxu0 0.0
    %491 = vmatprep.subr.mxu0 0.0
    %492 = vmatpush2.msra.mxu0 0.0
    %493 = vmatprep.subr.mxu0 0.0
    %494 = vmatpush2.msra.mxu0 0.0
    %495 = vmatprep.subr.mxu0 0.0
    %496 = vmatpush2.msra.mxu0 0.0
    %497 = vmatprep.subr.mxu0 0.0
    %498 = vmatpush2.msra.mxu0 0.0
    %499 = vmatprep.subr.mxu0 0.0
    %500 = vmatpush2.msra.mxu0 0.0
    %501 = vmatprep.mubr.f32.mxu0 0.0
    %502 = vmatmul.mubr.f32.gmra.mxu0 %v435
    %v503 = vpop.f32.mrf.mxu0
    %v504 = vadd.f32 0.0, %v503
    %v505 = vpop.f32.mrf.mxu0
    %506 = vdwg.mxu0
    %v507 = vadd.f32 %v433, %v504
    %v508 = vtanh.pop %v507
    %509 = vst.msk [vmem:[%s432] sm:$0x3] %vm184, %v508
    %s510 = scalar_lea.vmem [#allocation2], 8
    %v511 = vld [vmem:[%s510] sm:$0x3]
    %v513 = vsel %vm199, %v508, 0
    %515 = vmatprep.subr.mxu0 0.0
    %516 = vmatpush1.msra.mxu0 0.0
    %517 = vmatprep.subr.mxu0 0.0
    %518 = vmatpush1.msra.mxu0 0.0
    %519 = vmatprep.subr.mxu0 0.0
    %520 = vmatpush1.msra.mxu0 0.0
    %521 = vmatprep.subr.mxu0 0.0
    %522 = vmatpush1.msra.mxu0 0.0
    %523 = vmatprep.subr.mxu0 0.0
    %524 = vmatpush1.msra.mxu0 0.0
    %525 = vmatprep.subr.mxu0 0.0
    %526 = vmatpush1.msra.mxu0 0.0
    %527 = vmatprep.subr.mxu0 0.0
    %528 = vmatpush1.msra.mxu0 0.0
    %529 = vmatprep.subr.mxu0 0.0
    %530 = vmatpush1.msra.mxu0 0.0
    %531 = vmatprep.subr.mxu0 0.0
    %532 = vmatpush1.msra.mxu0 0.0
    %533 = vmatprep.subr.mxu0 0.0
    %534 = vmatpush1.msra.mxu0 0.0
    %535 = vmatprep.subr.mxu0 0.0
    %536 = vmatpush1.msra.mxu0 0.0
    %537 = vmatprep.subr.mxu0 0.0
    %538 = vmatpush1.msra.mxu0 0.0
    %539 = vmatprep.subr.mxu0 0.0
    %540 = vmatpush1.msra.mxu0 %v196
    %541 = vmatprep.subr.mxu0 0.0
    %542 = vmatpush1.msra.mxu0 %v195
    %543 = vmatprep.subr.mxu0 0.0
    %544 = vmatpush1.msra.mxu0 %v194
    %545 = vmatprep.subr.mxu0 0.0
    %546 = vmatpush1.msra.mxu0 %v193
    %547 = vmatprep.subr.mxu0 0.0
    %548 = vmatpush2.msra.mxu0 0.0
    %549 = vmatprep.subr.mxu0 0.0
    %550 = vmatpush2.msra.mxu0 0.0
    %551 = vmatprep.subr.mxu0 0.0
    %552 = vmatpush2.msra.mxu0 0.0
    %553 = vmatprep.subr.mxu0 0.0
    %554 = vmatpush2.msra.mxu0 0.0
    %555 = vmatprep.subr.mxu0 0.0
    %556 = vmatpush2.msra.mxu0 0.0
    %557 = vmatprep.subr.mxu0 0.0
    %558 = vmatpush2.msra.mxu0 0.0
    %559 = vmatprep.subr.mxu0 0.0
    %560 = vmatpush2.msra.mxu0 0.0
    %561 = vmatprep.subr.mxu0 0.0
    %562 = vmatpush2.msra.mxu0 0.0
    %563 = vmatprep.subr.mxu0 0.0
    %564 = vmatpush2.msra.mxu0 0.0
    %565 = vmatprep.subr.mxu0 0.0
    %566 = vmatpush2.msra.mxu0 0.0
    %567 = vmatprep.subr.mxu0 0.0
    %568 = vmatpush2.msra.mxu0 0.0
    %569 = vmatprep.subr.mxu0 0.0
    %570 = vmatpush2.msra.mxu0 0.0
    %571 = vmatprep.subr.mxu0 0.0
    %572 = vmatpush2.msra.mxu0 0.0
    %573 = vmatprep.subr.mxu0 0.0
    %574 = vmatpush2.msra.mxu0 0.0
    %575 = vmatprep.subr.mxu0 0.0
    %576 = vmatpush2.msra.mxu0 0.0
    %577 = vmatprep.subr.mxu0 0.0
    %578 = vmatpush2.msra.mxu0 0.0
    %579 = vmatprep.mubr.f32.mxu0 0.0
    %580 = vmatmul.mubr.f32.gmra.mxu0 %v513
    %v581 = vpop.f32.mrf.mxu0
    %v582 = vadd.f32 0.0, %v581
    %v583 = vpop.f32.mrf.mxu0
    %584 = vdwg.mxu0
    %v585 = vadd.f32 %v511, %v582
    %v586 = vtanh.pop %v585
    %587 = vst.msk [vmem:[%s510] sm:$0x3] %vm184, %v586
    %s588 = scalar_lea.vmem [#allocation2], 10
    %v589 = vld [vmem:[%s588] sm:$0x3]
    %v591 = vsel %vm199, %v586, 0
    %593 = vmatprep.subr.mxu0 0.0
    %594 = vmatpush1.msra.mxu0 0.0
    %595 = vmatprep.subr.mxu0 0.0
    %596 = vmatpush1.msra.mxu0 0.0
    %597 = vmatprep.subr.mxu0 0.0
    %598 = vmatpush1.msra.mxu0 0.0
    %599 = vmatprep.subr.mxu0 0.0
    %600 = vmatpush1.msra.mxu0 0.0
    %601 = vmatprep.subr.mxu0 0.0
    %602 = vmatpush1.msra.mxu0 0.0
    %603 = vmatprep.subr.mxu0 0.0
    %604 = vmatpush1.msra.mxu0 0.0
    %605 = vmatprep.subr.mxu0 0.0
    %606 = vmatpush1.msra.mxu0 0.0
    %607 = vmatprep.subr.mxu0 0.0
    %608 = vmatpush1.msra.mxu0 0.0
    %609 = vmatprep.subr.mxu0 0.0
    %610 = vmatpush1.msra.mxu0 0.0
    %611 = vmatprep.subr.mxu0 0.0
    %612 = vmatpush1.msra.mxu0 0.0
    %613 = vmatprep.subr.mxu0 0.0
    %614 = vmatpush1.msra.mxu0 0.0
    %615 = vmatprep.subr.mxu0 0.0
    %616 = vmatpush1.msra.mxu0 0.0
    %617 = vmatprep.subr.mxu0 0.0
    %618 = vmatpush1.msra.mxu0 %v196
    %619 = vmatprep.subr.mxu0 0.0
    %620 = vmatpush1.msra.mxu0 %v195
    %621 = vmatprep.subr.mxu0 0.0
    %622 = vmatpush1.msra.mxu0 %v194
    %623 = vmatprep.subr.mxu0 0.0
    %624 = vmatpush1.msra.mxu0 %v193
    %625 = vmatprep.subr.mxu0 0.0
    %626 = vmatpush2.msra.mxu0 0.0
    %627 = vmatprep.subr.mxu0 0.0
    %628 = vmatpush2.msra.mxu0 0.0
    %629 = vmatprep.subr.mxu0 0.0
    %630 = vmatpush2.msra.mxu0 0.0
    %631 = vmatprep.subr.mxu0 0.0
    %632 = vmatpush2.msra.mxu0 0.0
    %633 = vmatprep.subr.mxu0 0.0
    %634 = vmatpush2.msra.mxu0 0.0
    %635 = vmatprep.subr.mxu0 0.0
    %636 = vmatpush2.msra.mxu0 0.0
    %637 = vmatprep.subr.mxu0 0.0
    %638 = vmatpush2.msra.mxu0 0.0
    %639 = vmatprep.subr.mxu0 0.0
    %640 = vmatpush2.msra.mxu0 0.0
    %641 = vmatprep.subr.mxu0 0.0
    %642 = vmatpush2.msra.mxu0 0.0
    %643 = vmatprep.subr.mxu0 0.0
    %644 = vmatpush2.msra.mxu0 0.0
    %645 = vmatprep.subr.mxu0 0.0
    %646 = vmatpush2.msra.mxu0 0.0
    %647 = vmatprep.subr.mxu0 0.0
    %648 = vmatpush2.msra.mxu0 0.0
    %649 = vmatprep.subr.mxu0 0.0
    %650 = vmatpush2.msra.mxu0 0.0
    %651 = vmatprep.subr.mxu0 0.0
    %652 = vmatpush2.msra.mxu0 0.0
    %653 = vmatprep.subr.mxu0 0.0
    %654 = vmatpush2.msra.mxu0 0.0
    %655 = vmatprep.subr.mxu0 0.0
    %656 = vmatpush2.msra.mxu0 0.0
    %657 = vmatprep.mubr.f32.mxu0 0.0
    %658 = vmatmul.mubr.f32.gmra.mxu0 %v591
    %v659 = vpop.f32.mrf.mxu0
    %v660 = vadd.f32 0.0, %v659
    %v661 = vpop.f32.mrf.mxu0
    %662 = vdwg.mxu0
    %v663 = vadd.f32 %v589, %v660
    %v664 = vtanh.pop %v663
    %665 = vst.msk [vmem:[%s588] sm:$0x3] %vm184, %v664
    %s666 = scalar_lea.vmem [#allocation2], 12
    %v667 = vld [vmem:[%s666] sm:$0x3]
    %v669 = vsel %vm199, %v664, 0
    %671 = vmatprep.subr.mxu0 0.0
    %672 = vmatpush1.msra.mxu0 0.0
    %673 = vmatprep.subr.mxu0 0.0
    %674 = vmatpush1.msra.mxu0 0.0
    %675 = vmatprep.subr.mxu0 0.0
    %676 = vmatpush1.msra.mxu0 0.0
    %677 = vmatprep.subr.mxu0 0.0
    %678 = vmatpush1.msra.mxu0 0.0
    %679 = vmatprep.subr.mxu0 0.0
    %680 = vmatpush1.msra.mxu0 0.0
    %681 = vmatprep.subr.mxu0 0.0
    %682 = vmatpush1.msra.mxu0 0.0
    %683 = vmatprep.subr.mxu0 0.0
    %684 = vmatpush1.msra.mxu0 0.0
    %685 = vmatprep.subr.mxu0 0.0
    %686 = vmatpush1.msra.mxu0 0.0
    %687 = vmatprep.subr.mxu0 0.0
    %688 = vmatpush1.msra.mxu0 0.0
    %689 = vmatprep.subr.mxu0 0.0
    %690 = vmatpush1.msra.mxu0 0.0
    %691 = vmatprep.subr.mxu0 0.0
    %692 = vmatpush1.msra.mxu0 0.0
    %693 = vmatprep.subr.mxu0 0.0
    %694 = vmatpush1.msra.mxu0 0.0
    %695 = vmatprep.subr.mxu0 0.0
    %696 = vmatpush1.msra.mxu0 %v196
    %697 = vmatprep.subr.mxu0 0.0
    %698 = vmatpush1.msra.mxu0 %v195
    %699 = vmatprep.subr.mxu0 0.0
    %700 = vmatpush1.msra.mxu0 %v194
    %701 = vmatprep.subr.mxu0 0.0
    %702 = vmatpush1.msra.mxu0 %v193
    %703 = vmatprep.subr.mxu0 0.0
    %704 = vmatpush2.msra.mxu0 0.0
    %705 = vmatprep.subr.mxu0 0.0
    %706 = vmatpush2.msra.mxu0 0.0
    %707 = vmatprep.subr.mxu0 0.0
    %708 = vmatpush2.msra.mxu0 0.0
    %709 = vmatprep.subr.mxu0 0.0
    %710 = vmatpush2.msra.mxu0 0.0
    %711 = vmatprep.subr.mxu0 0.0
    %712 = vmatpush2.msra.mxu0 0.0
    %713 = vmatprep.subr.mxu0 0.0
    %714 = vmatpush2.msra.mxu0 0.0
    %715 = vmatprep.subr.mxu0 0.0
    %716 = vmatpush2.msra.mxu0 0.0
    %717 = vmatprep.subr.mxu0 0.0
    %718 = vmatpush2.msra.mxu0 0.0
    %719 = vmatprep.subr.mxu0 0.0
    %720 = vmatpush2.msra.mxu0 0.0
    %721 = vmatprep.subr.mxu0 0.0
    %722 = vmatpush2.msra.mxu0 0.0
    %723 = vmatprep.subr.mxu0 0.0
    %724 = vmatpush2.msra.mxu0 0.0
    %725 = vmatprep.subr.mxu0 0.0
    %726 = vmatpush2.msra.mxu0 0.0
    %727 = vmatprep.subr.mxu0 0.0
    %728 = vmatpush2.msra.mxu0 0.0
    %729 = vmatprep.subr.mxu0 0.0
    %730 = vmatpush2.msra.mxu0 0.0
    %731 = vmatprep.subr.mxu0 0.0
    %732 = vmatpush2.msra.mxu0 0.0
    %733 = vmatprep.subr.mxu0 0.0
    %734 = vmatpush2.msra.mxu0 0.0
    %735 = vmatprep.mubr.f32.mxu0 0.0
    %736 = vmatmul.mubr.f32.gmra.mxu0 %v669
    %v737 = vpop.f32.mrf.mxu0
    %v738 = vadd.f32 0.0, %v737
    %v739 = vpop.f32.mrf.mxu0
    %740 = vdwg.mxu0
    %v741 = vadd.f32 %v667, %v738
    %v742 = vtanh.pop %v741
    %743 = vst.msk [vmem:[%s666] sm:$0x3] %vm184, %v742
    %s744 = scalar_lea.vmem [#allocation2], 14
    %v745 = vld [vmem:[%s744] sm:$0x3]
    %v747 = vsel %vm199, %v742, 0
    %749 = vmatprep.subr.mxu0 0.0
    %750 = vmatpush1.msra.mxu0 0.0
    %751 = vmatprep.subr.mxu0 0.0
    %752 = vmatpush1.msra.mxu0 0.0
    %753 = vmatprep.subr.mxu0 0.0
    %754 = vmatpush1.msra.mxu0 0.0
    %755 = vmatprep.subr.mxu0 0.0
    %756 = vmatpush1.msra.mxu0 0.0
    %757 = vmatprep.subr.mxu0 0.0
    %758 = vmatpush1.msra.mxu0 0.0
    %759 = vmatprep.subr.mxu0 0.0
    %760 = vmatpush1.msra.mxu0 0.0
    %761 = vmatprep.subr.mxu0 0.0
    %762 = vmatpush1.msra.mxu0 0.0
    %763 = vmatprep.subr.mxu0 0.0
    %764 = vmatpush1.msra.mxu0 0.0
    %765 = vmatprep.subr.mxu0 0.0
    %766 = vmatpush1.msra.mxu0 0.0
    %767 = vmatprep.subr.mxu0 0.0
    %768 = vmatpush1.msra.mxu0 0.0
    %769 = vmatprep.subr.mxu0 0.0
    %770 = vmatpush1.msra.mxu0 0.0
    %771 = vmatprep.subr.mxu0 0.0
    %772 = vmatpush1.msra.mxu0 0.0
    %773 = vmatprep.subr.mxu0 0.0
    %774 = vmatpush1.msra.mxu0 %v196
    %775 = vmatprep.subr.mxu0 0.0
    %776 = vmatpush1.msra.mxu0 %v195
    %777 = vmatprep.subr.mxu0 0.0
    %778 = vmatpush1.msra.mxu0 %v194
    %779 = vmatprep.subr.mxu0 0.0
    %780 = vmatpush1.msra.mxu0 %v193
    %781 = vmatprep.subr.mxu0 0.0
    %782 = vmatpush2.msra.mxu0 0.0
    %783 = vmatprep.subr.mxu0 0.0
    %784 = vmatpush2.msra.mxu0 0.0
    %785 = vmatprep.subr.mxu0 0.0
    %786 = vmatpush2.msra.mxu0 0.0
    %787 = vmatprep.subr.mxu0 0.0
    %788 = vmatpush2.msra.mxu0 0.0
    %789 = vmatprep.subr.mxu0 0.0
    %790 = vmatpush2.msra.mxu0 0.0
    %791 = vmatprep.subr.mxu0 0.0
    %792 = vmatpush2.msra.mxu0 0.0
    %793 = vmatprep.subr.mxu0 0.0
    %794 = vmatpush2.msra.mxu0 0.0
    %795 = vmatprep.subr.mxu0 0.0
    %796 = vmatpush2.msra.mxu0 0.0
    %797 = vmatprep.subr.mxu0 0.0
    %798 = vmatpush2.msra.mxu0 0.0
    %799 = vmatprep.subr.mxu0 0.0
    %800 = vmatpush2.msra.mxu0 0.0
    %801 = vmatprep.subr.mxu0 0.0
    %802 = vmatpush2.msra.mxu0 0.0
    %803 = vmatprep.subr.mxu0 0.0
    %804 = vmatpush2.msra.mxu0 0.0
    %805 = vmatprep.subr.mxu0 0.0
    %806 = vmatpush2.msra.mxu0 0.0
    %807 = vmatprep.subr.mxu0 0.0
    %808 = vmatpush2.msra.mxu0 0.0
    %809 = vmatprep.subr.mxu0 0.0
    %810 = vmatpush2.msra.mxu0 0.0
    %811 = vmatprep.subr.mxu0 0.0
    %812 = vmatpush2.msra.mxu0 0.0
    %813 = vmatprep.mubr.f32.mxu0 0.0
    %814 = vmatmul.mubr.f32.gmra.mxu0 %v747
    %v815 = vpop.f32.mrf.mxu0
    %v816 = vadd.f32 0.0, %v815
    %v817 = vpop.f32.mrf.mxu0
    %818 = vdwg.mxu0
    %v819 = vadd.f32 %v745, %v816
    %v820 = vtanh.pop %v819
    %821 = vst.msk [vmem:[%s744] sm:$0x3] %vm184, %v820
    %822 = vst.msk [vmem:[#allocation3] sm:$0x3] %vm184, %v820
    %823 = vst.msk [vmem:[#allocation11] sm:$0x3] %vm184, %v820
    %v824 = vld [vmem:[%s5] sm:$0x1]
    %v825 = vld [vmem:[#allocation2] sm:$0x3]
    %v826 = vld [vmem:[#allocation2 + $0x2] sm:$0x3]
    %v827 = vld [vmem:[#allocation2 + $0x4] sm:$0x3]
    %v828 = vld [vmem:[#allocation2 + $0x6] sm:$0x3]
    %v829 = vld [vmem:[#allocation2 + $0x8] sm:$0x3]
    %v830 = vld [vmem:[#allocation2 + $0xa] sm:$0x3]
    %v831 = vld [vmem:[#allocation2 + $0xc] sm:$0x3]
    %v832 = vld [vmem:[#allocation2 + $0xe] sm:$0x3]
    %v834 = vlaneseq
    %v835 = vshrl.u32 %v834, 7
    %v836 = vsub.s32 0, %v835
    %v837 = vrot.slane %v824, %v836
    %v839 = vmul.f32 %v825, %v837
    %v840 = vmul.f32 %v826, %v837
    %v841 = vmul.f32 %v827, %v837
    %v842 = vmul.f32 %v828, %v837
    %v843 = vmul.f32 %v829, %v837
    %v844 = vmul.f32 %v830, %v837
    %v845 = vmul.f32 %v831, %v837
    %v846 = vmul.f32 %v832, %v837
    %v847 = vsel %vm184, %v839, 0.0
    %848 = vadd.xlane.f32.xlu0 %v847
    %v849 = vpop.xlane.xlu0 %848
    %v850 = vsel %vm184, %v840, 0.0
    %851 = vadd.xlane.f32.xlu0 %v850
    %v852 = vpop.xlane.xlu0 %851
    %v853 = vsel %vm184, %v841, 0.0
    %854 = vadd.xlane.f32.xlu0 %v853
    %v855 = vpop.xlane.xlu0 %854
    %v856 = vsel %vm184, %v842, 0.0
    %857 = vadd.xlane.f32.xlu0 %v856
    %v858 = vpop.xlane.xlu0 %857
    %v859 = vsel %vm184, %v843, 0.0
    %860 = vadd.xlane.f32.xlu0 %v859
    %v861 = vpop.xlane.xlu0 %860
    %v862 = vsel %vm184, %v844, 0.0
    %863 = vadd.xlane.f32.xlu0 %v862
    %v864 = vpop.xlane.xlu0 %863
    %v865 = vsel %vm184, %v845, 0.0
    %866 = vadd.xlane.f32.xlu0 %v865
    %v867 = vpop.xlane.xlu0 %866
    %v868 = vsel %vm184, %v846, 0.0
    %869 = vadd.xlane.f32.xlu0 %v868
    %v870 = vpop.xlane.xlu0 %869
    %v879 = vlaneseq
    %v880 = vand.u32 %v879, 127
    %v881 = vlaneseq
    %v882 = vshrl.u32 %v881, 7
    %v883 = vsub.s32 %v880, %v882
    %v884 = vrot.slane %v849, %v883
    %v885 = vlaneseq
    %v886 = vshrl.u32 %v885, 7
    %v887 = vsub.s32 %v880, %v886
    %v888 = vrot.slane %v852, %v887
    %v889 = vlaneseq
    %v890 = vshrl.u32 %v889, 7
    %v891 = vsub.s32 %v880, %v890
    %v892 = vrot.slane %v855, %v891
    %v893 = vlaneseq
    %v894 = vshrl.u32 %v893, 7
    %v895 = vsub.s32 %v880, %v894
    %v896 = vrot.slane %v858, %v895
    %v897 = vlaneseq
    %v898 = vshrl.u32 %v897, 7
    %v899 = vsub.s32 %v880, %v898
    %v900 = vrot.slane %v861, %v899
    %v901 = vlaneseq
    %v902 = vshrl.u32 %v901, 7
    %v903 = vsub.s32 %v880, %v902
    %v904 = vrot.slane %v864, %v903
    %v905 = vlaneseq
    %v906 = vshrl.u32 %v905, 7
    %v907 = vsub.s32 %v880, %v906
    %v908 = vrot.slane %v867, %v907
    %v909 = vlaneseq
    %v910 = vshrl.u32 %v909, 7
    %v911 = vsub.s32 %v880, %v910
    %v912 = vrot.slane %v870, %v911
    %vm913 = vcmask 1041409
    %v914 = vsel %vm913, %v888, %v884
    %vm915 = vcmask 1042434
    %v916 = vsel %vm915, %v892, %v914
    %vm917 = vcmask 1043459
    %v918 = vsel %vm917, %v896, %v916
    %vm919 = vcmask 1044484
    %v920 = vsel %vm919, %v900, %v918
    %vm921 = vcmask 1045509
    %v922 = vsel %vm921, %v904, %v920
    %vm923 = vcmask 1046534
    %v924 = vsel %vm923, %v908, %v922
    %vm925 = vcmask 1047559
    %v926 = vsel %vm925, %v912, %v924
    %928 = vxpose.xlu0.b32.start [1/16] %v926, 128
    %929 = vxpose.xlu0.b32.cont [2/16] 0.0, 128
    %930 = vxpose.xlu0.b32.cont [3/16] 0.0, 128
    %931 = vxpose.xlu0.b32.cont [4/16] 0.0, 128
    %932 = vxpose.xlu0.b32.cont [5/16] 0.0, 128
    %933 = vxpose.xlu0.b32.cont [6/16] 0.0, 128
    %934 = vxpose.xlu0.b32.cont [7/16] 0.0, 128
    %935 = vxpose.xlu0.b32.cont [8/16] 0.0, 128
    %936 = vxpose.xlu0.b32.cont [9/16] 0.0, 128
    %937 = vxpose.xlu0.b32.cont [10/16] 0.0, 128
    %938 = vxpose.xlu0.b32.cont [11/16] 0.0, 128
    %939 = vxpose.xlu0.b32.cont [12/16] 0.0, 128
    %940 = vxpose.xlu0.b32.cont [13/16] 0.0, 128
    %941 = vxpose.xlu0.b32.cont [14/16] 0.0, 128
    %942 = vxpose.xlu0.b32.cont [15/16] 0.0, 128
    %943 = vxpose.xlu0.b32.end [16/16] 0.0, 128
    %v944 = vpop.trf.xlu0
    %v945 = vpop.trf.xlu0
    %v946 = vpop.trf.xlu0
    %v947 = vpop.trf.xlu0
    %v948 = vpop.trf.xlu0
    %v949 = vpop.trf.xlu0
    %v950 = vpop.trf.xlu0
    %v951 = vpop.trf.xlu0
    %v952 = vpop.trf.xlu0
    %v953 = vpop.trf.xlu0
    %v954 = vpop.trf.xlu0
    %v955 = vpop.trf.xlu0
    %v956 = vpop.trf.xlu0
    %v957 = vpop.trf.xlu0
    %v958 = vpop.trf.xlu0
    %v959 = vpop.trf.xlu0
    %v960 = vld [vmem:[#allocation4] sm:$0x1]
    %v962 = vlaneseq
    %v963 = vshrl.u32 %v962, 7
    %v964 = vsub.s32 0, %v963
    %v965 = vrot.slane %v960, %v964
    %966 = vset.pattern.permute.xlu0 0
    %967 = vperm.xlu0 %966, %v965
    %v968 = vpop.permute.xlu0 %967
    %v970 = vadd.f32 %v944, %v968
    %vm971 = vcmask 58368
    %972 = vst.msk [vmem:[#allocation10] sm:$0x3] %vm971, %v970
    // Predicated region
    $region42: #{tpu_custom_call.1} parent=1 // pred_check
      _
    $region43: #{tpu_custom_call.1} parent=1 // pred_check_branch
      %974 = sbr.rel (0) target = $region45
    $region44: #{tpu_custom_call.1} parent=1 // pred_region
      %s976 = ssub.s32 32, 32
      %977 = vsyncadd [#allocation7], %s976
      %s979 = sshll.u32 [#allocation10], 4
      %s980 = int_to_ptr.vmem [resolvable:$true] %s979
      %982 = dma.vmem_to_hbm [thread:$0]  %s980, 32, %s7, [#allocation7]
    $region45: #{tpu_custom_call.1} parent=1 // pred_fallthru
      _
    // Predicated region
    $region46: #{tpu_custom_call.1} parent=1 // pred_check
      _
    $region47: #{tpu_custom_call.1} parent=1 // pred_check_branch
      %984 = sbr.rel (0) target = $region49
    $region48: #{tpu_custom_call.1} parent=1 // pred_region
      %s986 = ssub.s32 32, 32
      %987 = vsyncadd [#allocation12], %s986
      %s989 = sshll.u32 [#allocation11], 4
      %s990 = int_to_ptr.vmem [resolvable:$true] %s989
      %992 = dma.vmem_to_hbm [thread:$0]  %s990, 32, %s8, [#allocation12]
    $region49: #{tpu_custom_call.1} parent=1 // pred_fallthru
      _
    // Predicated region
    $region50: #{tpu_custom_call.1} parent=1 // pred_check
      _
    $region51: #{tpu_custom_call.1} parent=1 // pred_check_branch
      %994 = sbr.rel (0) target = $region53
    $region52: #{tpu_custom_call.1} parent=1 // pred_region
      %995 = dma.done [#allocation7], 32
    $region53: #{tpu_custom_call.1} parent=1 // pred_fallthru
      _
    // Predicated region
    $region54: #{tpu_custom_call.1} parent=1 // pred_check
      _
    $region55: #{tpu_custom_call.1} parent=1 // pred_check_branch
      %997 = sbr.rel (0) target = $region57
    $region56: #{tpu_custom_call.1} parent=1 // pred_region
      %998 = dma.done [#allocation12], 32
    $region57: #{tpu_custom_call.1} parent=1 // pred_fallthru
      _
    %999 = vsyncpa [#allocation6], 1
    %1000 = vsyncpa [#allocation9], 1
    %1001 = vsyncpa [#allocation7], 1
    %1002 = vsyncpa [#allocation12], 1

</llo_original>
